<compile_context>
chip_gen: v6e
topology: v6e:2x2x1
jax: 0.10.0
libtpu: 0.0.40
codegen_flags: <defaults>
</compile_context>

<pallas_src>
import functools

import numpy as np
import jax
import jax.numpy as jnp
from jax.experimental import pallas as pl
from jax.experimental.pallas import tpu as pltpu


_EPS = 1e-12  # F.normalize default eps


# ----------------------------------------------------------------------------
# Pallas kernel
# ----------------------------------------------------------------------------
def _cpr_kernel(x_full_ref, x_col_ref, out_ref, normed_ref, acc_ref,
                *, bn_out, inv_denom, inv_dsq, eps):
    i = pl.program_id(0)

    def _normalize(x):
        # Column-wise zero-mean + L2 normalization (torch: mean(dim=0), then
        # F.normalize(dim=0)).  Purely column-local, so it is valid both on the
        # full matrix and on an independent column block.
        if bn_out:
            return x
        zeroed = x - jnp.mean(x, axis=0, keepdims=True)
        norm = jnp.sqrt(jnp.sum(zeroed * zeroed, axis=0, keepdims=True))
        return zeroed / jnp.maximum(norm, eps)

    @pl.when(i == 0)
    def _init():
        # Full normalized matrix, computed once and reused as the matmul RHS.
        normed_ref[...] = _normalize(x_full_ref[...])
        acc_ref[...] = jnp.zeros_like(acc_ref)

    # Normalized columns of this block ([n, tile]); column-local recompute is
    # much cheaper than a dynamic lane-dim slice of the scratch.
    lhs = _normalize(x_col_ref[...])

    # Row block of the correlation matrix: normed[:, blk].T @ normed / denom.
    # Only the small [n, tile] tile is transposed; MXU accumulates in f32.
    cor_blk = jnp.dot(lhs.T, normed_ref[...],
                      preferred_element_type=jnp.float32) * inv_denom   # [tile, d]

    # diag(cor) for this block's columns, directly from column sums of squares
    # (no eye mask, no diagonal extraction from the [tile, d] tile).
    diag_blk = jnp.sum(lhs * lhs, axis=0, keepdims=True) * inv_denom    # [1, tile]

    # One-pass off-diagonal statistics: sum(cor^2) - sum(diag^2).
    ss = jnp.sum(cor_blk * cor_blk)
    dd = jnp.sum(diag_blk * diag_blk)
    acc_ref[...] = acc_ref[...] + (ss - dd)

    # Output block index is constant across the grid -> resident accumulator;
    # write the scaled value every step (last write is the final result).
    out_ref[...] = acc_ref[...] * inv_dsq


# ----------------------------------------------------------------------------
# Wrapper
# ----------------------------------------------------------------------------
def cpr_pallas(x, bn_out=False, *, col_tile=None, eps=_EPS):
    x = jnp.asarray(x, jnp.float32)
    n, d = x.shape

    # Tile the output-row (d) axis.  Lane-dim blocks must be multiples of 128
    # (or the full d).  Small problems degenerate to a single block.
    if col_tile is None:
        col_tile = d
        if d > 512 and d % 128 == 0:
            for t in (512, 256, 128):
                if d % t == 0:
                    col_tile = t
                    break
    assert d % col_tile == 0 and (col_tile == d or col_tile % 128 == 0), \
        "col_tile must divide d and be a multiple of 128 (or equal d)"

    num_blocks = d // col_tile
    denom = float(d) if bn_out else float(n - 1)
    kernel = functools.partial(
        _cpr_kernel, bn_out=bool(bn_out),
        inv_denom=1.0 / denom, inv_dsq=1.0 / float(d * d), eps=float(eps))

    # VMEM budget from actual buffers: x (double-buffered), x column block
    # (double-buffered), normed scratch, and a few [tile, d] temporaries.
    est = 4 * (2 * n * d + 2 * n * col_tile + n * d + 4 * col_tile * d)
    vmem_limit = int(min(max(2 * est + (4 << 20), 32 << 20), 64 << 20))

    out = pl.pallas_call(
        kernel,
        grid=(num_blocks,),
        in_specs=[
            # Full matrix (same block every step -> fetched once).
            pl.BlockSpec((n, d), lambda i: (0, 0)),
            # Column block for this grid step (becomes the cor row block).
            pl.BlockSpec((n, col_tile), lambda i: (0, i)),
        ],
        out_specs=pl.BlockSpec((1, 1), lambda i: (0, 0)),
        out_shape=jax.ShapeDtypeStruct((1, 1), jnp.float32),
        scratch_shapes=[
            pltpu.VMEM((n, d), jnp.float32),   # full normalized matrix
            pltpu.VMEM((1, 1), jnp.float32),   # running sum of squared off-diag
        ],
        compiler_params=pltpu.CompilerParams(
            dimension_semantics=("arbitrary",),   # grid axis is a reduction
            vmem_limit_bytes=vmem_limit),
    )(x, x)

    return out[0, 0]


# ----------------------------------------------------------------------------
# Pure-JAX reference (mirrors the torch module)
# ----------------------------------------------------------------------------
def cpr_ref(x, bn_out=False, eps=_EPS):
    x = jnp.asarray(x, jnp.float32)
    n, d = x.shape
    dot = functools.partial(jnp.dot, precision=jax.lax.Precision.HIGHEST)
    if bn_out:
        cor = dot(x.T, x) / d
    else:
        zeroed = x - jnp.mean(x, axis=0, keepdims=True)
        norm = jnp.sqrt(jnp.sum(zeroed * zeroed, axis=0, keepdims=True))
        normed = zeroed / jnp.maximum(norm, eps)
        cor = dot(normed.T, normed) / (n - 1)
    offdiag = 1.0 - jnp.eye(d, dtype=jnp.float32)
    no_diag = cor * offdiag
    return jnp.mean(no_diag * no_diag)


# ----------------------------------------------------------------------------
if __name__ == "__main__":
    # Small, module-consistent shape: n=128 samples of a d=256 descriptor.
    n, d = 128, 256
    key = jax.random.PRNGKey(0)
    x = jax.random.normal(key, (n, d), dtype=jnp.float32)

    # Default path (BN_out=False); col_tile=128 exercises the tiled grid (2 steps).
    out = jax.block_until_ready(cpr_pallas(x, bn_out=False, col_tile=128))
    ref = cpr_ref(x, bn_out=False)

    # BN_out=True path (raw Gram matrix / d).
    out_bn = jax.block_until_ready(cpr_pallas(x, bn_out=True, col_tile=128))
    ref_bn = cpr_ref(x, bn_out=True)

    ok = np.isfinite(float(out)) and np.isfinite(float(out_bn))
    ok &= np.allclose(float(out), float(ref), rtol=5e-3, atol=1e-6)
    ok &= np.allclose(float(out_bn), float(ref_bn), rtol=5e-3, atol=1e-6)
    assert ok, (float(out), float(ref), float(out_bn), float(ref_bn))
    print("KERNEL_OK")
</pallas_src>

<mosaic_0001>
module attributes {stable_mosaic.version = 11 : i64} {
  func.func @_cpr_kernel(%arg0: i32, %arg1: memref<128x256xf32, #tpu.memory_space<vmem>>, %arg2: memref<128x128xf32, #tpu.memory_space<vmem>>, %arg3: memref<1x1xf32, #tpu.memory_space<vmem>>, %arg4: memref<128x256xf32, #tpu.memory_space<vmem>>, %arg5: memref<1x1xf32, #tpu.memory_space<vmem>>) attributes {dimension_semantics = [#tpu.dimension_semantics<arbitrary>], iteration_bounds = array<i64: 2>, scalar_prefetch = 0 : i64, scratch_operands = 2 : i64, tpu.core_type = #tpu.core_type<tc>, window_params = [{pipeline_mode = #tpu.pipeline_mode<synchronous>, transform_indices = @transform_0, window_bounds = array<i64: 128, 256>}, {transform_indices = @transform_1, window_bounds = array<i64: 128, 128>}, {pipeline_mode = #tpu.pipeline_mode<synchronous>, transform_indices = @transform_2, window_bounds = array<i64: 1, 1>}]} {
    %c0_i32 = arith.constant 0 : i32
    %0 = arith.cmpi eq, %arg0, %c0_i32 : i32
    %1 = arith.extui %0 : i1 to i32
    %c0_i32_0 = arith.constant 0 : i32
    %2 = arith.cmpi ne, %1, %c0_i32_0 : i32
    scf.if %2 {
      %c0_22 = arith.constant 0 : index
      %c0_23 = arith.constant 0 : index
      %47 = vector.load %arg1[%c0_22, %c0_23] : memref<128x256xf32, #tpu.memory_space<vmem>>, vector<128x256xf32>
      %cst_24 = arith.constant dense<0.000000e+00> : vector<256xf32>
      %48 = vector.multi_reduction <add>, %47, %cst_24 [0] : vector<128x256xf32> to vector<256xf32>
      %49 = vector.shape_cast %48 : vector<256xf32> to vector<1x256xf32>
      %cst_25 = arith.constant 1.280000e+02 : f32
      %50 = vector.broadcast %cst_25 : f32 to vector<1x256xf32>
      %51 = arith.divf %49, %50 : vector<1x256xf32>
      %52 = vector.broadcast %51 : vector<1x256xf32> to vector<128x256xf32>
      %53 = arith.subf %47, %52 : vector<128x256xf32>
      %54 = arith.mulf %53, %53 : vector<128x256xf32>
      %cst_26 = arith.constant dense<0.000000e+00> : vector<256xf32>
      %55 = vector.multi_reduction <add>, %54, %cst_26 [0] : vector<128x256xf32> to vector<256xf32>
      %56 = vector.shape_cast %55 : vector<256xf32> to vector<1x256xf32>
      %57 = math.sqrt %56 : vector<1x256xf32>
      %cst_27 = arith.constant 9.99999996E-13 : f32
      %58 = vector.broadcast %cst_27 : f32 to vector<1x256xf32>
      %59 = arith.maximumf %57, %58 : vector<1x256xf32>
      %60 = vector.broadcast %59 : vector<1x256xf32> to vector<128x256xf32>
      %61 = arith.divf %53, %60 : vector<128x256xf32>
      %c0_28 = arith.constant 0 : index
      %c0_29 = arith.constant 0 : index
      %62 = vector.load %arg4[%c0_28, %c0_29] : memref<128x256xf32, #tpu.memory_space<vmem>>, vector<128x256xf32>
      tpu.vector_store %arg4[%c0_28, %c0_29], %61 {strides = array<i32>} : memref<128x256xf32, #tpu.memory_space<vmem>>, vector<128x256xf32>,
      %cst_30 = arith.constant 0.000000e+00 : f32
      %63 = vector.broadcast %cst_30 : f32 to vector<1x1xf32>
      %c0_31 = arith.constant 0 : index
      %c0_32 = arith.constant 0 : index
      %64 = vector.load %arg5[%c0_31, %c0_32] : memref<1x1xf32, #tpu.memory_space<vmem>>, vector<1x1xf32>
      tpu.vector_store %arg5[%c0_31, %c0_32], %63 {strides = array<i32>} : memref<1x1xf32, #tpu.memory_space<vmem>>, vector<1x1xf32>,
    } else {
    }
    %c0 = arith.constant 0 : index
    %c0_1 = arith.constant 0 : index
    %3 = vector.load %arg2[%c0, %c0_1] : memref<128x128xf32, #tpu.memory_space<vmem>>, vector<128x128xf32>
    %cst = arith.constant dense<0.000000e+00> : vector<128xf32>
    %4 = vector.multi_reduction <add>, %3, %cst [0] : vector<128x128xf32> to vector<128xf32>
    %5 = vector.shape_cast %4 : vector<128xf32> to vector<1x128xf32>
    %cst_2 = arith.constant 1.280000e+02 : f32
    %6 = vector.broadcast %cst_2 : f32 to vector<1x128xf32>
    %7 = arith.divf %5, %6 : vector<1x128xf32>
    %8 = vector.broadcast %7 : vector<1x128xf32> to vector<128x128xf32>
    %9 = arith.subf %3, %8 : vector<128x128xf32>
    %10 = arith.mulf %9, %9 : vector<128x128xf32>
    %cst_3 = arith.constant dense<0.000000e+00> : vector<128xf32>
    %11 = vector.multi_reduction <add>, %10, %cst_3 [0] : vector<128x128xf32> to vector<128xf32>
    %12 = vector.shape_cast %11 : vector<128xf32> to vector<1x128xf32>
    %13 = math.sqrt %12 : vector<1x128xf32>
    %cst_4 = arith.constant 9.99999996E-13 : f32
    %14 = vector.broadcast %cst_4 : f32 to vector<1x128xf32>
    %15 = arith.maximumf %13, %14 : vector<1x128xf32>
    %16 = vector.broadcast %15 : vector<1x128xf32> to vector<128x128xf32>
    %17 = arith.divf %9, %16 : vector<128x128xf32>
    %18 = tpu.transpose %17, [1, 0] : vector<128x128xf32> -> vector<128x128xf32>
    %c0_5 = arith.constant 0 : index
    %c0_6 = arith.constant 0 : index
    %19 = vector.load %arg4[%c0_5, %c0_6] : memref<128x256xf32, #tpu.memory_space<vmem>>, vector<128x256xf32>
    %cst_7 = arith.constant dense<0.000000e+00> : vector<128x256xf32>
    %20 = tpu.matmul %18, %19, %cst_7 {dimension_numbers = #tpu.dot_dimension_numbers<[1], [0], [0], [1], [0, 0, 1, 1], [], []>} : vector<128x128xf32>, vector<128x256xf32>, vector<128x256xf32> -> vector<128x256xf32>
    %cst_8 = arith.constant 0.00787401571 : f32
    %21 = vector.broadcast %cst_8 : f32 to vector<128x256xf32>
    %22 = arith.mulf %20, %21 : vector<128x256xf32>
    %23 = arith.mulf %17, %17 : vector<128x128xf32>
    %cst_9 = arith.constant dense<0.000000e+00> : vector<128xf32>
    %24 = vector.multi_reduction <add>, %23, %cst_9 [0] : vector<128x128xf32> to vector<128xf32>
    %25 = vector.shape_cast %24 : vector<128xf32> to vector<1x128xf32>
    %cst_10 = arith.constant 0.00787401571 : f32
    %26 = vector.broadcast %cst_10 : f32 to vector<1x128xf32>
    %27 = arith.mulf %25, %26 : vector<1x128xf32>
    %28 = arith.mulf %22, %22 : vector<128x256xf32>
    %29 = vector.shape_cast %28 : vector<128x256xf32> to vector<1x128x256xf32>
    %cst_11 = arith.constant dense<0.000000e+00> : vector<1xf32>
    %30 = vector.multi_reduction <add>, %29, %cst_11 [1, 2] : vector<1x128x256xf32> to vector<1xf32>
    %31 = vector.shape_cast %30 : vector<1xf32> to vector<1x1x1xf32>
    %32 = vector.extract %31[0, 0, 0] : f32 from vector<1x1x1xf32>
    %33 = arith.mulf %27, %27 : vector<1x128xf32>
    %34 = vector.shape_cast %33 : vector<1x128xf32> to vector<1x1x128xf32>
    %cst_12 = arith.constant dense<0.000000e+00> : vector<1xf32>
    %35 = vector.multi_reduction <add>, %34, %cst_12 [1, 2] : vector<1x1x128xf32> to vector<1xf32>
    %36 = vector.shape_cast %35 : vector<1xf32> to vector<1x1x1xf32>
    %37 = vector.extract %36[0, 0, 0] : f32 from vector<1x1x1xf32>
    %c0_13 = arith.constant 0 : index
    %c0_14 = arith.constant 0 : index
    %38 = vector.load %arg5[%c0_13, %c0_14] : memref<1x1xf32, #tpu.memory_space<vmem>>, vector<1x1xf32>
    %39 = arith.subf %32, %37 : f32
    %40 = vector.broadcast %39 : f32 to vector<1x1xf32>
    %41 = arith.addf %38, %40 : vector<1x1xf32>
    %c0_15 = arith.constant 0 : index
    %c0_16 = arith.constant 0 : index
    %42 = vector.load %arg5[%c0_15, %c0_16] : memref<1x1xf32, #tpu.memory_space<vmem>>, vector<1x1xf32>
    tpu.vector_store %arg5[%c0_15, %c0_16], %41 {strides = array<i32>} : memref<1x1xf32, #tpu.memory_space<vmem>>, vector<1x1xf32>,
    %c0_17 = arith.constant 0 : index
    %c0_18 = arith.constant 0 : index
    %43 = vector.load %arg5[%c0_17, %c0_18] : memref<1x1xf32, #tpu.memory_space<vmem>>, vector<1x1xf32>
    %cst_19 = arith.constant 1.52587891E-5 : f32
    %44 = vector.broadcast %cst_19 : f32 to vector<1x1xf32>
    %45 = arith.mulf %43, %44 : vector<1x1xf32>
    %c0_20 = arith.constant 0 : index
    %c0_21 = arith.constant 0 : index
    %46 = vector.load %arg3[%c0_20, %c0_21] : memref<1x1xf32, #tpu.memory_space<vmem>>, vector<1x1xf32>
    tpu.vector_store %arg3[%c0_20, %c0_21], %45 {strides = array<i32>} : memref<1x1xf32, #tpu.memory_space<vmem>>, vector<1x1xf32>,
    return
  }
  func.func @transform_0(%arg0: i32) -> (i32, i32) {
    %c0_i32 = arith.constant 0 : i32
    %c0_i32_0 = arith.constant 0 : i32
    %c0_i32_1 = arith.constant 0 : i32
    return %c0_i32, %c0_i32_0 : i32, i32
  }
  func.func @transform_1(%arg0: i32) -> (i32, i32) {
    %c0_i32 = arith.constant 0 : i32
    %c0_i32_0 = arith.constant 0 : i32
    return %c0_i32, %arg0 : i32, i32
  }
  func.func @transform_2(%arg0: i32) -> (i32, i32) {
    %c0_i32 = arith.constant 0 : i32
    %c0_i32_0 = arith.constant 0 : i32
    %c0_i32_1 = arith.constant 0 : i32
    return %c0_i32, %c0_i32_0 : i32, i32
  }
}

</mosaic_0001>

<llo_original>
// kernel: tpu_custom_call.1
$region0: #{tpu_custom_call.1}
  #allocation0 [shape = 'u32[]', space=smem, size = 0x4, offset = 0x4, fixed_abs, tag = 'smem constant byte address 0x4 - core index']
  #allocation1 [shape = 'u32[144,128]{1,0:T(1,128)}', space=vmem, size = 0x12000, scoped, tag = 'internal scratch']
  #allocation2 [shape = 'f32[128,256]{1,0:T(8,128)}', space=vmem, size = 0x20000, scoped, tag = 'scratch operand']
  #allocation3 [shape = 'f32[1,1]{1,0:T(1,128)}', space=vmem, size = 0x200, scoped, tag = 'scratch operand']
  %s0 = inlined_call_operand.hbm [shape: f32[128,256], index: 0, kind: input, shape index: {}]
  %s1 = inlined_call_operand.hbm [shape: f32[128,256], index: 1, kind: input, shape index: {}]
  %s2 = inlined_call_operand.hbm [shape: f32[1,1], index: 2, kind: output, shape index: {}]
  %s3 = sld [smem:[#allocation0]]
  $region53: #{tpu_custom_call.1} parent=0
    _
  %s5 = ssub.s32 1, %s3
  %s6 = scalar_select 0, %s5, %s3
  $region1: #{tpu_custom_call.1} parent=0
    #allocation4 [shape = 'u8[131072]{0}', space=vmem, size = 0x20000, scoped, tag = 'input window, operand 0, single buffered']
    #allocation5 [shape = 's32[2]{0}', space=sflag, size = 0x8, scoped, tag = 'scoped memory for tpu_custom_call.1']
    #allocation6 [shape = 's32[2]{0}', space=sflag, size = 0x8, scoped, tag = 'scoped memory for tpu_custom_call.1']
    #allocation7 [shape = 'u8[131072]{0}', space=vmem, size = 0x20000, scoped, tag = 'input window, operand 1']
    #allocation8 [shape = 's32[2]{0}', space=sflag, size = 0x8, scoped, tag = 'scoped memory for tpu_custom_call.1']
    #allocation9 [shape = 'u8[512]{0}', space=vmem, size = 0x400, scoped, tag = 'output window, operand 0, single buffered']
    %7 = vsyncpa [#allocation5], 0
    %8 = vsyncpa [#allocation8], 0
    %s9 = scalar_lea.sflag [#allocation8], 1
    %10 = vsyncpa %s9, 0
    %11 = vsyncpa [#allocation6], 0
    loop: start=0, step=1, limit=4
    $region2: #{tpu_custom_call.1} parent=1 // loop_pre_header
      _
    $region3: #{tpu_custom_call.1} parent=1 // loop_header
      %s13 = sphi 0, %s17
      %p14 = scmp.ge.s32.totalorder %s13, 4
      %s21 = sphi 0, %s21
      %s23 = sphi 0, %s21
      %s24 = sphi 0, %s23
      %s38 = sphi 0, %s24
      %s44 = sphi 0, %s46
      %s47 = sphi 0, %s44
      %s48 = sphi 0, %s47
      %s64 = sphi 0, %s48
      %s68 = sphi 0, %s68
      %s70 = sphi 0, %s68
      %s71 = sphi 0, %s70
      %s85 = sphi 0, %s71
    $region4: #{tpu_custom_call.1} parent=1 // loop_header_branch
      %16 = sbr.rel (%p14) target = $region8
    $region5: #{tpu_custom_call.1} parent=1 // loop_body
      %s18 = ssub.s32 %s13, 1
      %s19 = ssub.s32 %s13, 2
      %s20 = sadd.s32 %s13, 1
      %s22 = sadd.s32 %s21, 1
      %p25 = scmp.eq.s32.totalorder %s13, 1
      %p26 = scmp.ne.s32.totalorder %s21, %s23
      %p27 = scmp.eq.s32.totalorder %s13, 0
      %p28 = por %p26, %p27
      %p29 = scmp.ne.s32.totalorder %s21, %s23
      %p30 = scmp.eq.s32.totalorder %s18, 1
      %p31 = por %p29, %p30
      %p32 = scmp.ne.s32.totalorder %s23, %s24
      %p33 = scmp.eq.s32.totalorder %s18, 0
      %p34 = por %p32, %p33
      %p35 = scmp.ne.s32.totalorder %s23, %s24
      %p36 = scmp.eq.s32.totalorder %s19, 1
      %p37 = por %p35, %p36
      %p39 = scmp.ne.s32.totalorder %s24, %s38
      %p40 = scmp.eq.s32.totalorder %s19, 0
      %p41 = por %p39, %p40
      %s42 = ssub.s32 %s13, %s20
      %p43 = scmp.eq.s32.totalorder %s42, 0
      %s45 = sadd.s32 %s44, 1
      %s46 = scalar_select %p43, %s44, %s45
      %p49 = pneg %p43
      %p50 = scmp.eq.s32.totalorder %s13, 1
      %p51 = por %p49, %p50
      %p52 = scmp.ne.s32.totalorder %s44, %s47
      %p53 = scmp.eq.s32.totalorder %s13, 0
      %p54 = por %p52, %p53
      %p55 = scmp.ne.s32.totalorder %s44, %s47
      %p56 = scmp.eq.s32.totalorder %s18, 1
      %p57 = por %p55, %p56
      %p58 = scmp.ne.s32.totalorder %s47, %s48
      %p59 = scmp.eq.s32.totalorder %s18, 0
      %p60 = por %p58, %p59
      %p61 = scmp.ne.s32.totalorder %s47, %s48
      %p62 = scmp.eq.s32.totalorder %s19, 1
      %p63 = por %p61, %p62
      %p65 = scmp.ne.s32.totalorder %s48, %s64
      %p66 = scmp.eq.s32.totalorder %s19, 0
      %p67 = por %p65, %p66
      %s69 = sadd.s32 %s68, 1
      %p72 = scmp.eq.s32.totalorder %s13, 1
      %p73 = scmp.ne.s32.totalorder %s68, %s70
      %p74 = scmp.eq.s32.totalorder %s13, 0
      %p75 = por %p73, %p74
      %p76 = scmp.ne.s32.totalorder %s68, %s70
      %p77 = scmp.eq.s32.totalorder %s18, 1
      %p78 = por %p76, %p77
      %p79 = scmp.ne.s32.totalorder %s70, %s71
      %p80 = scmp.eq.s32.totalorder %s18, 0
      %p81 = por %p79, %p80
      %p82 = scmp.ne.s32.totalorder %s70, %s71
      %p83 = scmp.eq.s32.totalorder %s19, 1
      %p84 = por %p82, %p83
      %p86 = scmp.ne.s32.totalorder %s71, %s85
      %p87 = scmp.eq.s32.totalorder %s19, 0
      %p88 = por %p86, %p87
      %p89 = scmp.le.s32.totalorder 1, %s13
      %p90 = scmp.lt.s32.totalorder %s13, 3
      %p91 = pnand %p89, %p90
      %p92 = pneg %p91
      // Predicated region
      $region9: #{tpu_custom_call.1} parent=5 // pred_check
        _
      $region10: #{tpu_custom_call.1} parent=5 // pred_check_branch
        %94 = sbr.rel (%p91) target = $region12
      $region11: #{tpu_custom_call.1} parent=5 // pred_region
        %s95 = ssub.s32 %s13, 1
        // Predicated region
        $region13: #{tpu_custom_call.1} parent=11 // pred_check
          %p96 = pneg %p34
        $region14: #{tpu_custom_call.1} parent=11 // pred_check_branch
          %98 = sbr.rel (%p96) target = $region16
        $region15: #{tpu_custom_call.1} parent=11 // pred_region
          %s100 = ssub.s32 4096, 4096
          %101 = vsyncadd [#allocation5], %s100
          %s102 = sshll.u32 [#allocation4], 4
          %s103 = int_to_ptr.vmem [resolvable:$true] %s102
          %108 = dma.hbm_to_vmem [thread:$0]  %s0, 4096, %s103, [#allocation5], 256, 256, 16
        $region16: #{tpu_custom_call.1} parent=11 // pred_fallthru
          _
      $region12: #{tpu_custom_call.1} parent=5 // pred_fallthru
        _
      %p109 = scmp.lt.s32.totalorder %s13, 2
      // Predicated region
      $region17: #{tpu_custom_call.1} parent=5 // pred_check
        %p110 = pneg %p109
      $region18: #{tpu_custom_call.1} parent=5 // pred_check_branch
        %112 = sbr.rel (%p110) target = $region20
      $region19: #{tpu_custom_call.1} parent=5 // pred_region
        // Predicated region
        $region21: #{tpu_custom_call.1} parent=19 // pred_check
          %p113 = pneg %p54
        $region22: #{tpu_custom_call.1} parent=19 // pred_check_branch
          %115 = sbr.rel (%p113) target = $region24
        $region23: #{tpu_custom_call.1} parent=19 // pred_region
          %s116 = sand.u32 %s44, 1
          %s117 = scalar_lea.sflag [#allocation8], %s116
          %s118 = sand.u32 %s44, 1
          %s119 = smul.addr %s118, 128
          %s120 = scalar_lea.vmem [#allocation7], %s119
          %s122 = ssub.s32 2048, 2048
          %123 = vsyncadd %s117, %s122
          %s124 = smul.addr %s13, 128
          %s125 = scalar_lea.hbm %s1, %s124
          %s126 = sshll.u32 %s120, 4
          %s127 = int_to_ptr.vmem [resolvable:$true] %s126
          %132 = dma.hbm_to_vmem [thread:$0]  %s125, 2048, %s127, %s117, 256, 128, 8
        $region24: #{tpu_custom_call.1} parent=19 // pred_fallthru
          _
      $region20: #{tpu_custom_call.1} parent=5 // pred_fallthru
        _
      %p133 = scmp.le.s32.totalorder 1, %s13
      %p134 = scmp.lt.s32.totalorder %s13, 3
      %p135 = pnand %p133, %p134
      %p136 = pneg %p135
      // Predicated region
      $region25: #{tpu_custom_call.1} parent=5 // pred_check
        _
      $region26: #{tpu_custom_call.1} parent=5 // pred_check_branch
        %138 = sbr.rel (%p135) target = $region28
      $region27: #{tpu_custom_call.1} parent=5 // pred_region
        %s139 = ssub.s32 %s13, 1
        // Predicated region
        $region29: #{tpu_custom_call.1} parent=27 // pred_check
          %p140 = pneg %p34
        $region30: #{tpu_custom_call.1} parent=27 // pred_check_branch
          %142 = sbr.rel (%p140) target = $region32
        $region31: #{tpu_custom_call.1} parent=27 // pred_region
          %143 = dma.done [#allocation5], 4096
        $region32: #{tpu_custom_call.1} parent=27 // pred_fallthru
          _
        %s144 = sand.u32 %s47, 1
        %s145 = scalar_lea.sflag [#allocation8], %s144
        %s146 = sand.u32 %s47, 1
        %s147 = smul.addr %s146, 128
        %s148 = scalar_lea.vmem [#allocation7], %s147
        // Predicated region
        $region33: #{tpu_custom_call.1} parent=27 // pred_check
          %p149 = pneg %p60
        $region34: #{tpu_custom_call.1} parent=27 // pred_check_branch
          %151 = sbr.rel (%p149) target = $region36
        $region35: #{tpu_custom_call.1} parent=27 // pred_region
          %152 = dma.done %s145, 2048
        $region36: #{tpu_custom_call.1} parent=27 // pred_fallthru
          _
        %p153 = pneg %p34
        %p154 = pneg %p31
        %s155 = sand.u32 %s47, 1
        %s156 = scalar_lea.sflag [#allocation8], %s155
        %s157 = sand.u32 %s47, 1
        %s158 = smul.addr %s157, 128
        %s159 = scalar_lea.vmem [#allocation7], %s158
        %p160 = pneg %p60
        %p161 = pneg %p57
        %p162 = pneg %p81
        %p163 = pneg %p78
        %p164 = scmp.eq.s32.totalorder %s18, 0
        // Predicated region
        $region37: #{tpu_custom_call.1} parent=27 // pred_check
          %p165 = pneg %p164
        $region38: #{tpu_custom_call.1} parent=27 // pred_check_branch
          %167 = sbr.rel (%p165) target = $region40
        $region39: #{tpu_custom_call.1} parent=27 // pred_region
          %v168 = vld [vmem:[#allocation4] sm:$0xff]
          %v169 = vld [vmem:[#allocation4 + $0x8] sm:$0xff]
          %v170 = vld [vmem:[#allocation4 + $0x10] sm:$0xff]
          %v171 = vld [vmem:[#allocation4 + $0x18] sm:$0xff]
          %v172 = vld [vmem:[#allocation4 + $0x20] sm:$0xff]
          %v173 = vld [vmem:[#allocation4 + $0x28] sm:$0xff]
          %v174 = vld [vmem:[#allocation4 + $0x30] sm:$0xff]
          %v175 = vld [vmem:[#allocation4 + $0x38] sm:$0xff]
          %v176 = vld [vmem:[#allocation4 + $0x40] sm:$0xff]
          %v177 = vld [vmem:[#allocation4 + $0x48] sm:$0xff]
          %v178 = vld [vmem:[#allocation4 + $0x50] sm:$0xff]
          %v179 = vld [vmem:[#allocation4 + $0x58] sm:$0xff]
          %v180 = vld [vmem:[#allocation4 + $0x60] sm:$0xff]
          %v181 = vld [vmem:[#allocation4 + $0x68] sm:$0xff]
          %v182 = vld [vmem:[#allocation4 + $0x70] sm:$0xff]
          %v183 = vld [vmem:[#allocation4 + $0x78] sm:$0xff]
          %v184 = vld [vmem:[#allocation4 + $0x80] sm:$0xff]
          %v185 = vld [vmem:[#allocation4 + $0x88] sm:$0xff]
          %v186 = vld [vmem:[#allocation4 + $0x90] sm:$0xff]
          %v187 = vld [vmem:[#allocation4 + $0x98] sm:$0xff]
          %v188 = vld [vmem:[#allocation4 + $0xa0] sm:$0xff]
          %v189 = vld [vmem:[#allocation4 + $0xa8] sm:$0xff]
          %v190 = vld [vmem:[#allocation4 + $0xb0] sm:$0xff]
          %v191 = vld [vmem:[#allocation4 + $0xb8] sm:$0xff]
          %v192 = vld [vmem:[#allocation4 + $0xc0] sm:$0xff]
          %v193 = vld [vmem:[#allocation4 + $0xc8] sm:$0xff]
          %v194 = vld [vmem:[#allocation4 + $0xd0] sm:$0xff]
          %v195 = vld [vmem:[#allocation4 + $0xd8] sm:$0xff]
          %v196 = vld [vmem:[#allocation4 + $0xe0] sm:$0xff]
          %v197 = vld [vmem:[#allocation4 + $0xe8] sm:$0xff]
          %v198 = vld [vmem:[#allocation4 + $0xf0] sm:$0xff]
          %v199 = vld [vmem:[#allocation4 + $0xf8] sm:$0xff]
          %v200 = vadd.f32 %v168, %v170
          %v201 = vadd.f32 %v200, %v172
          %v202 = vadd.f32 %v201, %v174
          %v203 = vadd.f32 %v202, %v176
          %v204 = vadd.f32 %v203, %v178
          %v205 = vadd.f32 %v204, %v180
          %v206 = vadd.f32 %v205, %v182
          %v207 = vadd.f32 %v206, %v184
          %v208 = vadd.f32 %v207, %v186
          %v209 = vadd.f32 %v208, %v188
          %v210 = vadd.f32 %v209, %v190
          %v211 = vadd.f32 %v210, %v192
          %v212 = vadd.f32 %v211, %v194
          %v213 = vadd.f32 %v212, %v196
          %v214 = vadd.f32 %v213, %v198
          %v215 = vrot.slane %v214, 4
          %v216 = vadd.f32 %v214, %v215
          %v217 = vrot.slane %v216, 2
          %v218 = vadd.f32 %v216, %v217
          %v219 = vrot.slane %v218, 1
          %v220 = vadd.f32 %v218, %v219
          %v221 = vadd.f32 %v169, %v171
          %v222 = vadd.f32 %v221, %v173
          %v223 = vadd.f32 %v222, %v175
          %v224 = vadd.f32 %v223, %v177
          %v225 = vadd.f32 %v224, %v179
          %v226 = vadd.f32 %v225, %v181
          %v227 = vadd.f32 %v226, %v183
          %v228 = vadd.f32 %v227, %v185
          %v229 = vadd.f32 %v228, %v187
          %v230 = vadd.f32 %v229, %v189
          %v231 = vadd.f32 %v230, %v191
          %v232 = vadd.f32 %v231, %v193
          %v233 = vadd.f32 %v232, %v195
          %v234 = vadd.f32 %v233, %v197
          %v235 = vadd.f32 %v234, %v199
          %v236 = vrot.slane %v235, 4
          %v237 = vadd.f32 %v235, %v236
          %v238 = vrot.slane %v237, 2
          %v239 = vadd.f32 %v237, %v238
          %v240 = vrot.slane %v239, 1
          %v241 = vadd.f32 %v239, %v240
          %v242 = vrcp.pop 128.0
          %v243 = vmul.f32 %v220, %v242
          %v244 = vmul.f32 %v241, %v242
          %v245 = vsub.f32 %v168, %v243
          %v246 = vsub.f32 %v169, %v244
          %v247 = vsub.f32 %v170, %v243
          %v248 = vsub.f32 %v171, %v244
          %v249 = vsub.f32 %v172, %v243
          %v250 = vsub.f32 %v173, %v244
          %v251 = vsub.f32 %v174, %v243
          %v252 = vsub.f32 %v175, %v244
          %v253 = vsub.f32 %v176, %v243
          %v254 = vsub.f32 %v177, %v244
          %v255 = vsub.f32 %v178, %v243
          %v256 = vsub.f32 %v179, %v244
          %v257 = vsub.f32 %v180, %v243
          %v258 = vsub.f32 %v181, %v244
          %v259 = vsub.f32 %v182, %v243
          %v260 = vsub.f32 %v183, %v244
          %v261 = vsub.f32 %v184, %v243
          %v262 = vsub.f32 %v185, %v244
          %v263 = vsub.f32 %v186, %v243
          %v264 = vsub.f32 %v187, %v244
          %v265 = vsub.f32 %v188, %v243
          %v266 = vsub.f32 %v189, %v244
          %v267 = vsub.f32 %v190, %v243
          %v268 = vsub.f32 %v191, %v244
          %v269 = vsub.f32 %v192, %v243
          %v270 = vsub.f32 %v193, %v244
          %v271 = vsub.f32 %v194, %v243
          %v272 = vsub.f32 %v195, %v244
          %v273 = vsub.f32 %v196, %v243
          %v274 = vsub.f32 %v197, %v244
          %v275 = vsub.f32 %v198, %v243
          %v276 = vsub.f32 %v199, %v244
          %v277 = vmul.f32 %v245, %v245
          %v278 = vmul.f32 %v246, %v246
          %v279 = vmul.f32 %v247, %v247
          %v280 = vmul.f32 %v248, %v248
          %v281 = vmul.f32 %v249, %v249
          %v282 = vmul.f32 %v250, %v250
          %v283 = vmul.f32 %v251, %v251
          %v284 = vmul.f32 %v252, %v252
          %v285 = vmul.f32 %v253, %v253
          %v286 = vmul.f32 %v254, %v254
          %v287 = vmul.f32 %v255, %v255
          %v288 = vmul.f32 %v256, %v256
          %v289 = vmul.f32 %v257, %v257
          %v290 = vmul.f32 %v258, %v258
          %v291 = vmul.f32 %v259, %v259
          %v292 = vmul.f32 %v260, %v260
          %v293 = vmul.f32 %v261, %v261
          %v294 = vmul.f32 %v262, %v262
          %v295 = vmul.f32 %v263, %v263
          %v296 = vmul.f32 %v264, %v264
          %v297 = vmul.f32 %v265, %v265
          %v298 = vmul.f32 %v266, %v266
          %v299 = vmul.f32 %v267, %v267
          %v300 = vmul.f32 %v268, %v268
          %v301 = vmul.f32 %v269, %v269
          %v302 = vmul.f32 %v270, %v270
          %v303 = vmul.f32 %v271, %v271
          %v304 = vmul.f32 %v272, %v272
          %v305 = vmul.f32 %v273, %v273
          %v306 = vmul.f32 %v274, %v274
          %v307 = vmul.f32 %v275, %v275
          %v308 = vmul.f32 %v276, %v276
          %v309 = vadd.f32 %v277, %v279
          %v310 = vadd.f32 %v309, %v281
          %v311 = vadd.f32 %v310, %v283
          %v312 = vadd.f32 %v311, %v285
          %v313 = vadd.f32 %v312, %v287
          %v314 = vadd.f32 %v313, %v289
          %v315 = vadd.f32 %v314, %v291
          %v316 = vadd.f32 %v315, %v293
          %v317 = vadd.f32 %v316, %v295
          %v318 = vadd.f32 %v317, %v297
          %v319 = vadd.f32 %v318, %v299
          %v320 = vadd.f32 %v319, %v301
          %v321 = vadd.f32 %v320, %v303
          %v322 = vadd.f32 %v321, %v305
          %v323 = vadd.f32 %v322, %v307
          %v324 = vrot.slane %v323, 4
          %v325 = vadd.f32 %v323, %v324
          %v326 = vrot.slane %v325, 2
          %v327 = vadd.f32 %v325, %v326
          %v328 = vrot.slane %v327, 1
          %v329 = vadd.f32 %v327, %v328
          %v330 = vadd.f32 %v278, %v280
          %v331 = vadd.f32 %v330, %v282
          %v332 = vadd.f32 %v331, %v284
          %v333 = vadd.f32 %v332, %v286
          %v334 = vadd.f32 %v333, %v288
          %v335 = vadd.f32 %v334, %v290
          %v336 = vadd.f32 %v335, %v292
          %v337 = vadd.f32 %v336, %v294
          %v338 = vadd.f32 %v337, %v296
          %v339 = vadd.f32 %v338, %v298
          %v340 = vadd.f32 %v339, %v300
          %v341 = vadd.f32 %v340, %v302
          %v342 = vadd.f32 %v341, %v304
          %v343 = vadd.f32 %v342, %v306
          %v344 = vadd.f32 %v343, %v308
          %v345 = vrot.slane %v344, 4
          %v346 = vadd.f32 %v344, %v345
          %v347 = vrot.slane %v346, 2
          %v348 = vadd.f32 %v346, %v347
          %v349 = vrot.slane %v348, 1
          %v350 = vadd.f32 %v348, %v349
          %v351 = vrsqrt.pop %v329
          %v352 = vmul.f32 %v329, %v351
          %vm353 = vcmp.eq.f32.partialorder %v329, inf
          %v354 = vsel %vm353, %v329, %v352
          %vm355 = vcmp.eq.f32.partialorder %v329, 0.0
          %v356 = vand.u32 %v329, 2147483648
          %v357 = vsel %vm355, %v356, %v354
          %v358 = vrsqrt.pop %v350
          %v359 = vmul.f32 %v350, %v358
          %vm360 = vcmp.eq.f32.partialorder %v350, inf
          %v361 = vsel %vm360, %v350, %v359
          %vm362 = vcmp.eq.f32.partialorder %v350, 0.0
          %v363 = vand.u32 %v350, 2147483648
          %v364 = vsel %vm362, %v363, %v361
          %v365 = vmax.f32 %v357, 1e-12
          %v366 = vmax.f32 %v364, 1e-12
          %v367 = vrcp.pop %v365
          %v368 = vmul.f32 %v245, %v367
          %v369 = vrcp.pop %v366
          %v370 = vmul.f32 %v246, %v369
          %v371 = vmul.f32 %v247, %v367
          %v372 = vmul.f32 %v248, %v369
          %v373 = vmul.f32 %v249, %v367
          %v374 = vmul.f32 %v250, %v369
          %v375 = vmul.f32 %v251, %v367
          %v376 = vmul.f32 %v252, %v369
          %v377 = vmul.f32 %v253, %v367
          %v378 = vmul.f32 %v254, %v369
          %v379 = vmul.f32 %v255, %v367
          %v380 = vmul.f32 %v256, %v369
          %v381 = vmul.f32 %v257, %v367
          %v382 = vmul.f32 %v258, %v369
          %v383 = vmul.f32 %v259, %v367
          %v384 = vmul.f32 %v260, %v369
          %v385 = vmul.f32 %v261, %v367
          %v386 = vmul.f32 %v262, %v369
          %v387 = vmul.f32 %v263, %v367
          %v388 = vmul.f32 %v264, %v369
          %v389 = vmul.f32 %v265, %v367
          %v390 = vmul.f32 %v266, %v369
          %v391 = vmul.f32 %v267, %v367
          %v392 = vmul.f32 %v268, %v369
          %v393 = vmul.f32 %v269, %v367
          %v394 = vmul.f32 %v270, %v369
          %v395 = vmul.f32 %v271, %v367
          %v396 = vmul.f32 %v272, %v369
          %v397 = vmul.f32 %v273, %v367
          %v398 = vmul.f32 %v274, %v369
          %v399 = vmul.f32 %v275, %v367
          %v400 = vmul.f32 %v276, %v369
          %401 = vst [vmem:[#allocation2] sm:$0xff] %v368
          %402 = vst [vmem:[#allocation2 + $0x8] sm:$0xff] %v370
          %403 = vst [vmem:[#allocation2 + $0x10] sm:$0xff] %v371
          %404 = vst [vmem:[#allocation2 + $0x18] sm:$0xff] %v372
          %405 = vst [vmem:[#allocation2 + $0x20] sm:$0xff] %v373
          %406 = vst [vmem:[#allocation2 + $0x28] sm:$0xff] %v374
          %407 = vst [vmem:[#allocation2 + $0x30] sm:$0xff] %v375
          %408 = vst [vmem:[#allocation2 + $0x38] sm:$0xff] %v376
          %409 = vst [vmem:[#allocation2 + $0x40] sm:$0xff] %v377
          %410 = vst [vmem:[#allocation2 + $0x48] sm:$0xff] %v378
          %411 = vst [vmem:[#allocation2 + $0x50] sm:$0xff] %v379
          %412 = vst [vmem:[#allocation2 + $0x58] sm:$0xff] %v380
          %413 = vst [vmem:[#allocation2 + $0x60] sm:$0xff] %v381
          %414 = vst [vmem:[#allocation2 + $0x68] sm:$0xff] %v382
          %415 = vst [vmem:[#allocation2 + $0x70] sm:$0xff] %v383
          %416 = vst [vmem:[#allocation2 + $0x78] sm:$0xff] %v384
          %417 = vst [vmem:[#allocation2 + $0x80] sm:$0xff] %v385
          %418 = vst [vmem:[#allocation2 + $0x88] sm:$0xff] %v386
          %419 = vst [vmem:[#allocation2 + $0x90] sm:$0xff] %v387
          %420 = vst [vmem:[#allocation2 + $0x98] sm:$0xff] %v388
          %421 = vst [vmem:[#allocation2 + $0xa0] sm:$0xff] %v389
          %422 = vst [vmem:[#allocation2 + $0xa8] sm:$0xff] %v390
          %423 = vst [vmem:[#allocation2 + $0xb0] sm:$0xff] %v391
          %424 = vst [vmem:[#allocation2 + $0xb8] sm:$0xff] %v392
          %425 = vst [vmem:[#allocation2 + $0xc0] sm:$0xff] %v393
          %426 = vst [vmem:[#allocation2 + $0xc8] sm:$0xff] %v394
          %427 = vst [vmem:[#allocation2 + $0xd0] sm:$0xff] %v395
          %428 = vst [vmem:[#allocation2 + $0xd8] sm:$0xff] %v396
          %429 = vst [vmem:[#allocation2 + $0xe0] sm:$0xff] %v397
          %430 = vst [vmem:[#allocation2 + $0xe8] sm:$0xff] %v398
          %431 = vst [vmem:[#allocation2 + $0xf0] sm:$0xff] %v399
          %432 = vst [vmem:[#allocation2 + $0xf8] sm:$0xff] %v400
          %vm433 = vcmask 0
          %434 = vst.msk [vmem:[#allocation3] sm:$0x1] %vm433, 0.0
        $region40: #{tpu_custom_call.1} parent=27 // pred_fallthru
          _
        %v435 = vld [vmem:[%s148] sm:$0xff]
        %v436 = vld [vmem:[%s148 + $0x8] sm:$0xff]
        %v437 = vld [vmem:[%s148 + $0x10] sm:$0xff]
        %v438 = vld [vmem:[%s148 + $0x18] sm:$0xff]
        %v439 = vld [vmem:[%s148 + $0x20] sm:$0xff]
        %v440 = vld [vmem:[%s148 + $0x28] sm:$0xff]
        %v441 = vld [vmem:[%s148 + $0x30] sm:$0xff]
        %v442 = vld [vmem:[%s148 + $0x38] sm:$0xff]
        %v443 = vld [vmem:[%s148 + $0x40] sm:$0xff]
        %v444 = vld [vmem:[%s148 + $0x48] sm:$0xff]
        %v445 = vld [vmem:[%s148 + $0x50] sm:$0xff]
        %v446 = vld [vmem:[%s148 + $0x58] sm:$0xff]
        %v447 = vld [vmem:[%s148 + $0x60] sm:$0xff]
        %v448 = vld [vmem:[%s148 + $0x68] sm:$0xff]
        %v449 = vld [vmem:[%s148 + $0x70] sm:$0xff]
        %v450 = vld [vmem:[%s148 + $0x78] sm:$0xff]
        %v451 = vadd.f32 %v435, %v436
        %v452 = vadd.f32 %v451, %v437
        %v453 = vadd.f32 %v452, %v438
        %v454 = vadd.f32 %v453, %v439
        %v455 = vadd.f32 %v454, %v440
        %v456 = vadd.f32 %v455, %v441
        %v457 = vadd.f32 %v456, %v442
        %v458 = vadd.f32 %v457, %v443
        %v459 = vadd.f32 %v458, %v444
        %v460 = vadd.f32 %v459, %v445
        %v461 = vadd.f32 %v460, %v446
        %v462 = vadd.f32 %v461, %v447
        %v463 = vadd.f32 %v462, %v448
        %v464 = vadd.f32 %v463, %v449
        %v465 = vadd.f32 %v464, %v450
        %v466 = vrot.slane %v465, 4
        %v467 = vadd.f32 %v465, %v466
        %v468 = vrot.slane %v467, 2
        %v469 = vadd.f32 %v467, %v468
        %v470 = vrot.slane %v469, 1
        %v471 = vadd.f32 %v469, %v470
        %v472 = vrcp.pop 128.0
        %v473 = vmul.f32 %v471, %v472
        %v474 = vsub.f32 %v435, %v473
        %v475 = vsub.f32 %v436, %v473
        %v476 = vsub.f32 %v437, %v473
        %v477 = vsub.f32 %v438, %v473
        %v478 = vsub.f32 %v439, %v473
        %v479 = vsub.f32 %v440, %v473
        %v480 = vsub.f32 %v441, %v473
        %v481 = vsub.f32 %v442, %v473
        %v482 = vsub.f32 %v443, %v473
        %v483 = vsub.f32 %v444, %v473
        %v484 = vsub.f32 %v445, %v473
        %v485 = vsub.f32 %v446, %v473
        %v486 = vsub.f32 %v447, %v473
        %v487 = vsub.f32 %v448, %v473
        %v488 = vsub.f32 %v449, %v473
        %v489 = vsub.f32 %v450, %v473
        %v490 = vmul.f32 %v474, %v474
        %v491 = vmul.f32 %v475, %v475
        %v492 = vmul.f32 %v476, %v476
        %v493 = vmul.f32 %v477, %v477
        %v494 = vmul.f32 %v478, %v478
        %v495 = vmul.f32 %v479, %v479
        %v496 = vmul.f32 %v480, %v480
        %v497 = vmul.f32 %v481, %v481
        %v498 = vmul.f32 %v482, %v482
        %v499 = vmul.f32 %v483, %v483
        %v500 = vmul.f32 %v484, %v484
        %v501 = vmul.f32 %v485, %v485
        %v502 = vmul.f32 %v486, %v486
        %v503 = vmul.f32 %v487, %v487
        %v504 = vmul.f32 %v488, %v488
        %v505 = vmul.f32 %v489, %v489
        %v506 = vadd.f32 %v490, %v491
        %v507 = vadd.f32 %v506, %v492
        %v508 = vadd.f32 %v507, %v493
        %v509 = vadd.f32 %v508, %v494
        %v510 = vadd.f32 %v509, %v495
        %v511 = vadd.f32 %v510, %v496
        %v512 = vadd.f32 %v511, %v497
        %v513 = vadd.f32 %v512, %v498
        %v514 = vadd.f32 %v513, %v499
        %v515 = vadd.f32 %v514, %v500
        %v516 = vadd.f32 %v515, %v501
        %v517 = vadd.f32 %v516, %v502
        %v518 = vadd.f32 %v517, %v503
        %v519 = vadd.f32 %v518, %v504
        %v520 = vadd.f32 %v519, %v505
        %v521 = vrot.slane %v520, 4
        %v522 = vadd.f32 %v520, %v521
        %v523 = vrot.slane %v522, 2
        %v524 = vadd.f32 %v522, %v523
        %v525 = vrot.slane %v524, 1
        %v526 = vadd.f32 %v524, %v525
        %v527 = vrsqrt.pop %v526
        %v528 = vmul.f32 %v526, %v527
        %vm529 = vcmp.eq.f32.partialorder %v526, inf
        %v530 = vsel %vm529, %v526, %v528
        %vm531 = vcmp.eq.f32.partialorder %v526, 0.0
        %v532 = vand.u32 %v526, 2147483648
        %v533 = vsel %vm531, %v532, %v530
        %v534 = vmax.f32 %v533, 1e-12
        %v535 = vrcp.pop %v534
        %v536 = vmul.f32 %v474, %v535
        %v537 = vmul.f32 %v475, %v535
        %v538 = vmul.f32 %v476, %v535
        %v539 = vmul.f32 %v477, %v535
        %v540 = vmul.f32 %v478, %v535
        %v541 = vmul.f32 %v479, %v535
        %v542 = vmul.f32 %v480, %v535
        %v543 = vmul.f32 %v481, %v535
        %v544 = vmul.f32 %v482, %v535
        %v545 = vmul.f32 %v483, %v535
        %v546 = vmul.f32 %v484, %v535
        %v547 = vmul.f32 %v485, %v535
        %v548 = vmul.f32 %v486, %v535
        %v549 = vmul.f32 %v487, %v535
        %v550 = vmul.f32 %v488, %v535
        %v551 = vmul.f32 %v489, %v535
        %552 = vxpose.xlu0.b32.start [1/16] %v536, 128
        %553 = vxpose.xlu0.b32.cont [2/16] %v537, 128
        %554 = vxpose.xlu0.b32.cont [3/16] %v538, 128
        %555 = vxpose.xlu0.b32.cont [4/16] %v539, 128
        %556 = vxpose.xlu0.b32.cont [5/16] %v540, 128
        %557 = vxpose.xlu0.b32.cont [6/16] %v541, 128
        %558 = vxpose.xlu0.b32.cont [7/16] %v542, 128
        %559 = vxpose.xlu0.b32.cont [8/16] %v543, 128
        %560 = vxpose.xlu0.b32.cont [9/16] %v544, 128
        %561 = vxpose.xlu0.b32.cont [10/16] %v545, 128
        %562 = vxpose.xlu0.b32.cont [11/16] %v546, 128
        %563 = vxpose.xlu0.b32.cont [12/16] %v547, 128
        %564 = vxpose.xlu0.b32.cont [13/16] %v548, 128
        %565 = vxpose.xlu0.b32.cont [14/16] %v549, 128
        %566 = vxpose.xlu0.b32.cont [15/16] %v550, 128
        %567 = vxpose.xlu0.b32.end [16/16] %v551, 128
        %v568 = vpop.trf.xlu0
        %v569 = vpop.trf.xlu0
        %v570 = vpop.trf.xlu0
        %v571 = vpop.trf.xlu0
        %v572 = vpop.trf.xlu0
        %v573 = vpop.trf.xlu0
        %v574 = vpop.trf.xlu0
        %v575 = vpop.trf.xlu0
        %v576 = vpop.trf.xlu0
        %v577 = vpop.trf.xlu0
        %v578 = vpop.trf.xlu0
        %v579 = vpop.trf.xlu0
        %v580 = vpop.trf.xlu0
        %v581 = vpop.trf.xlu0
        %v582 = vpop.trf.xlu0
        %v583 = vpop.trf.xlu0
        %v584 = vld [vmem:[#allocation2] sm:$0xff]
        %v585 = vld [vmem:[#allocation2 + $0x8] sm:$0xff]
        %v586 = vld [vmem:[#allocation2 + $0x10] sm:$0xff]
        %v587 = vld [vmem:[#allocation2 + $0x18] sm:$0xff]
        %v588 = vld [vmem:[#allocation2 + $0x20] sm:$0xff]
        %v589 = vld [vmem:[#allocation2 + $0x28] sm:$0xff]
        %v590 = vld [vmem:[#allocation2 + $0x30] sm:$0xff]
        %v591 = vld [vmem:[#allocation2 + $0x38] sm:$0xff]
        %v592 = vld [vmem:[#allocation2 + $0x40] sm:$0xff]
        %v593 = vld [vmem:[#allocation2 + $0x48] sm:$0xff]
        %v594 = vld [vmem:[#allocation2 + $0x50] sm:$0xff]
        %v595 = vld [vmem:[#allocation2 + $0x58] sm:$0xff]
        %v596 = vld [vmem:[#allocation2 + $0x60] sm:$0xff]
        %v597 = vld [vmem:[#allocation2 + $0x68] sm:$0xff]
        %v598 = vld [vmem:[#allocation2 + $0x70] sm:$0xff]
        %v599 = vld [vmem:[#allocation2 + $0x78] sm:$0xff]
        %v600 = vld [vmem:[#allocation2 + $0x80] sm:$0xff]
        %v601 = vld [vmem:[#allocation2 + $0x88] sm:$0xff]
        %v602 = vld [vmem:[#allocation2 + $0x90] sm:$0xff]
        %v603 = vld [vmem:[#allocation2 + $0x98] sm:$0xff]
        %v604 = vld [vmem:[#allocation2 + $0xa0] sm:$0xff]
        %v605 = vld [vmem:[#allocation2 + $0xa8] sm:$0xff]
        %v606 = vld [vmem:[#allocation2 + $0xb0] sm:$0xff]
        %v607 = vld [vmem:[#allocation2 + $0xb8] sm:$0xff]
        %v608 = vld [vmem:[#allocation2 + $0xc0] sm:$0xff]
        %v609 = vld [vmem:[#allocation2 + $0xc8] sm:$0xff]
        %v610 = vld [vmem:[#allocation2 + $0xd0] sm:$0xff]
        %v611 = vld [vmem:[#allocation2 + $0xd8] sm:$0xff]
        %v612 = vld [vmem:[#allocation2 + $0xe0] sm:$0xff]
        %v613 = vld [vmem:[#allocation2 + $0xe8] sm:$0xff]
        %v614 = vld [vmem:[#allocation2 + $0xf0] sm:$0xff]
        %v615 = vld [vmem:[#allocation2 + $0xf8] sm:$0xff]
        %616 = vmatprep.subr.mxu0 %v615
        %617 = vmatpush1.msra.mxu0 %v614
        %618 = vmatprep.subr.mxu0 %v613
        %619 = vmatpush1.msra.mxu0 %v612
        %620 = vmatprep.subr.mxu0 %v611
        %621 = vmatpush1.msra.mxu0 %v610
        %622 = vmatprep.subr.mxu0 %v609
        %623 = vmatpush1.msra.mxu0 %v608
        %624 = vmatprep.subr.mxu0 %v607
        %625 = vmatpush1.msra.mxu0 %v606
        %626 = vmatprep.subr.mxu0 %v605
        %627 = vmatpush1.msra.mxu0 %v604
        %628 = vmatprep.subr.mxu0 %v603
        %629 = vmatpush1.msra.mxu0 %v602
        %630 = vmatprep.subr.mxu0 %v601
        %631 = vmatpush1.msra.mxu0 %v600
        %632 = vmatprep.subr.mxu0 %v599
        %633 = vmatpush1.msra.mxu0 %v598
        %634 = vmatprep.subr.mxu0 %v597
        %635 = vmatpush1.msra.mxu0 %v596
        %636 = vmatprep.subr.mxu0 %v595
        %637 = vmatpush1.msra.mxu0 %v594
        %638 = vmatprep.subr.mxu0 %v593
        %639 = vmatpush1.msra.mxu0 %v592
        %640 = vmatprep.subr.mxu0 %v591
        %641 = vmatpush1.msra.mxu0 %v590
        %642 = vmatprep.subr.mxu0 %v589
        %643 = vmatpush1.msra.mxu0 %v588
        %644 = vmatprep.subr.mxu0 %v587
        %645 = vmatpush1.msra.mxu0 %v586
        %646 = vmatprep.subr.mxu0 %v585
        %647 = vmatpush1.msra.mxu0 %v584
        %648 = vmatprep.subr.mxu0 0.0
        %649 = vmatpush2.msra.mxu0 0.0
        %650 = vmatprep.subr.mxu0 0.0
        %651 = vmatpush2.msra.mxu0 0.0
        %652 = vmatprep.subr.mxu0 0.0
        %653 = vmatpush2.msra.mxu0 0.0
        %654 = vmatprep.subr.mxu0 0.0
        %655 = vmatpush2.msra.mxu0 0.0
        %656 = vmatprep.subr.mxu0 0.0
        %657 = vmatpush2.msra.mxu0 0.0
        %658 = vmatprep.subr.mxu0 0.0
        %659 = vmatpush2.msra.mxu0 0.0
        %660 = vmatprep.subr.mxu0 0.0
        %661 = vmatpush2.msra.mxu0 0.0
        %662 = vmatprep.subr.mxu0 0.0
        %663 = vmatpush2.msra.mxu0 0.0
        %664 = vmatprep.subr.mxu0 0.0
        %665 = vmatpush2.msra.mxu0 0.0
        %666 = vmatprep.subr.mxu0 0.0
        %667 = vmatpush2.msra.mxu0 0.0
        %668 = vmatprep.subr.mxu0 0.0
        %669 = vmatpush2.msra.mxu0 0.0
        %670 = vmatprep.subr.mxu0 0.0
        %671 = vmatpush2.msra.mxu0 0.0
        %672 = vmatprep.subr.mxu0 0.0
        %673 = vmatpush2.msra.mxu0 0.0
        %674 = vmatprep.subr.mxu0 0.0
        %675 = vmatpush2.msra.mxu0 0.0
        %676 = vmatprep.subr.mxu0 0.0
        %677 = vmatpush2.msra.mxu0 0.0
        %678 = vmatprep.subr.mxu0 0.0
        %679 = vmatpush2.msra.mxu0 0.0
        %680 = vmatprep.mubr.f32.mxu0 0.0
        %681 = vmatmul.mubr.f32.gmra.mxu0 %v568
        %v682 = vpop.f32.mrf.mxu0
        %v683 = vadd.f32 0.0, %v682
        %v684 = vpop.f32.mrf.mxu0
        %v685 = vadd.f32 0.0, %v684
        %686 = vmatprep.mubr.f32.mxu0 0.0
        %687 = vmatmul.mubr.f32.gmra.mxu0 %v569
        %v688 = vpop.f32.mrf.mxu0
        %v689 = vadd.f32 0.0, %v688
        %v690 = vpop.f32.mrf.mxu0
        %v691 = vadd.f32 0.0, %v690
        %692 = vmatprep.mubr.f32.mxu0 0.0
        %693 = vmatmul.mubr.f32.gmra.mxu0 %v570
        %v694 = vpop.f32.mrf.mxu0
        %v695 = vadd.f32 0.0, %v694
        %v696 = vpop.f32.mrf.mxu0
        %v697 = vadd.f32 0.0, %v696
        %698 = vmatprep.mubr.f32.mxu0 0.0
        %699 = vmatmul.mubr.f32.gmra.mxu0 %v571
        %v700 = vpop.f32.mrf.mxu0
        %v701 = vadd.f32 0.0, %v700
        %v702 = vpop.f32.mrf.mxu0
        %v703 = vadd.f32 0.0, %v702
        %704 = vmatprep.mubr.f32.mxu0 0.0
        %705 = vmatmul.mubr.f32.gmra.mxu0 %v572
        %v706 = vpop.f32.mrf.mxu0
        %v707 = vadd.f32 0.0, %v706
        %v708 = vpop.f32.mrf.mxu0
        %v709 = vadd.f32 0.0, %v708
        %710 = vmatprep.mubr.f32.mxu0 0.0
        %711 = vmatmul.mubr.f32.gmra.mxu0 %v573
        %v712 = vpop.f32.mrf.mxu0
        %v713 = vadd.f32 0.0, %v712
        %v714 = vpop.f32.mrf.mxu0
        %v715 = vadd.f32 0.0, %v714
        %716 = vmatprep.mubr.f32.mxu0 0.0
        %717 = vmatmul.mubr.f32.gmra.mxu0 %v574
        %v718 = vpop.f32.mrf.mxu0
        %v719 = vadd.f32 0.0, %v718
        %v720 = vpop.f32.mrf.mxu0
        %v721 = vadd.f32 0.0, %v720
        %722 = vmatprep.mubr.f32.mxu0 0.0
        %723 = vmatmul.mubr.f32.gmra.mxu0 %v575
        %v724 = vpop.f32.mrf.mxu0
        %v725 = vadd.f32 0.0, %v724
        %v726 = vpop.f32.mrf.mxu0
        %v727 = vadd.f32 0.0, %v726
        %728 = vmatprep.mubr.f32.mxu0 0.0
        %729 = vmatmul.mubr.f32.gmra.mxu0 %v576
        %v730 = vpop.f32.mrf.mxu0
        %v731 = vadd.f32 0.0, %v730
        %v732 = vpop.f32.mrf.mxu0
        %v733 = vadd.f32 0.0, %v732
        %734 = vmatprep.mubr.f32.mxu0 0.0
        %735 = vmatmul.mubr.f32.gmra.mxu0 %v577
        %v736 = vpop.f32.mrf.mxu0
        %v737 = vadd.f32 0.0, %v736
        %v738 = vpop.f32.mrf.mxu0
        %v739 = vadd.f32 0.0, %v738
        %740 = vmatprep.mubr.f32.mxu0 0.0
        %741 = vmatmul.mubr.f32.gmra.mxu0 %v578
        %v742 = vpop.f32.mrf.mxu0
        %v743 = vadd.f32 0.0, %v742
        %v744 = vpop.f32.mrf.mxu0
        %v745 = vadd.f32 0.0, %v744
        %746 = vmatprep.mubr.f32.mxu0 0.0
        %747 = vmatmul.mubr.f32.gmra.mxu0 %v579
        %v748 = vpop.f32.mrf.mxu0
        %v749 = vadd.f32 0.0, %v748
        %v750 = vpop.f32.mrf.mxu0
        %v751 = vadd.f32 0.0, %v750
        %752 = vmatprep.mubr.f32.mxu0 0.0
        %753 = vmatmul.mubr.f32.gmra.mxu0 %v580
        %v754 = vpop.f32.mrf.mxu0
        %v755 = vadd.f32 0.0, %v754
        %v756 = vpop.f32.mrf.mxu0
        %v757 = vadd.f32 0.0, %v756
        %758 = vmatprep.mubr.f32.mxu0 0.0
        %759 = vmatmul.mubr.f32.gmra.mxu0 %v581
        %v760 = vpop.f32.mrf.mxu0
        %v761 = vadd.f32 0.0, %v760
        %v762 = vpop.f32.mrf.mxu0
        %v763 = vadd.f32 0.0, %v762
        %764 = vmatprep.mubr.f32.mxu0 0.0
        %765 = vmatmul.mubr.f32.gmra.mxu0 %v582
        %v766 = vpop.f32.mrf.mxu0
        %v767 = vadd.f32 0.0, %v766
        %v768 = vpop.f32.mrf.mxu0
        %v769 = vadd.f32 0.0, %v768
        %770 = vmatprep.mubr.f32.mxu0 0.0
        %771 = vmatmul.mubr.f32.gmra.mxu0 %v583
        %v772 = vpop.f32.mrf.mxu0
        %v773 = vadd.f32 0.0, %v772
        %v774 = vpop.f32.mrf.mxu0
        %v775 = vadd.f32 0.0, %v774
        %776 = vdwg.mxu0
        %v777 = vmul.f32 %v683, 0.007874016
        %v778 = vmul.f32 %v685, 0.007874016
        %v779 = vmul.f32 %v689, 0.007874016
        %v780 = vmul.f32 %v691, 0.007874016
        %v781 = vmul.f32 %v695, 0.007874016
        %v782 = vmul.f32 %v697, 0.007874016
        %v783 = vmul.f32 %v701, 0.007874016
        %v784 = vmul.f32 %v703, 0.007874016
        %v785 = vmul.f32 %v707, 0.007874016
        %v786 = vmul.f32 %v709, 0.007874016
        %v787 = vmul.f32 %v713, 0.007874016
        %v788 = vmul.f32 %v715, 0.007874016
        %v789 = vmul.f32 %v719, 0.007874016
        %v790 = vmul.f32 %v721, 0.007874016
        %v791 = vmul.f32 %v725, 0.007874016
        %v792 = vmul.f32 %v727, 0.007874016
        %v793 = vmul.f32 %v731, 0.007874016
        %v794 = vmul.f32 %v733, 0.007874016
        %v795 = vmul.f32 %v737, 0.007874016
        %v796 = vmul.f32 %v739, 0.007874016
        %v797 = vmul.f32 %v743, 0.007874016
        %v798 = vmul.f32 %v745, 0.007874016
        %v799 = vmul.f32 %v749, 0.007874016
        %v800 = vmul.f32 %v751, 0.007874016
        %v801 = vmul.f32 %v755, 0.007874016
        %v802 = vmul.f32 %v757, 0.007874016
        %v803 = vmul.f32 %v761, 0.007874016
        %v804 = vmul.f32 %v763, 0.007874016
        %v805 = vmul.f32 %v767, 0.007874016
        %v806 = vmul.f32 %v769, 0.007874016
        %v807 = vmul.f32 %v773, 0.007874016
        %v808 = vmul.f32 %v775, 0.007874016
        %v809 = vmul.f32 %v536, %v536
        %v810 = vmul.f32 %v537, %v537
        %v811 = vmul.f32 %v538, %v538
        %v812 = vmul.f32 %v539, %v539
        %v813 = vmul.f32 %v540, %v540
        %v814 = vmul.f32 %v541, %v541
        %v815 = vmul.f32 %v542, %v542
        %v816 = vmul.f32 %v543, %v543
        %v817 = vmul.f32 %v544, %v544
        %v818 = vmul.f32 %v545, %v545
        %v819 = vmul.f32 %v546, %v546
        %v820 = vmul.f32 %v547, %v547
        %v821 = vmul.f32 %v548, %v548
        %v822 = vmul.f32 %v549, %v549
        %v823 = vmul.f32 %v550, %v550
        %v824 = vmul.f32 %v551, %v551
        %v825 = vadd.f32 %v809, %v810
        %v826 = vadd.f32 %v825, %v811
        %v827 = vadd.f32 %v826, %v812
        %v828 = vadd.f32 %v827, %v813
        %v829 = vadd.f32 %v828, %v814
        %v830 = vadd.f32 %v829, %v815
        %v831 = vadd.f32 %v830, %v816
        %v832 = vadd.f32 %v831, %v817
        %v833 = vadd.f32 %v832, %v818
        %v834 = vadd.f32 %v833, %v819
        %v835 = vadd.f32 %v834, %v820
        %v836 = vadd.f32 %v835, %v821
        %v837 = vadd.f32 %v836, %v822
        %v838 = vadd.f32 %v837, %v823
        %v839 = vadd.f32 %v838, %v824
        %v840 = vrot.slane %v839, 4
        %v841 = vadd.f32 %v839, %v840
        %v842 = vrot.slane %v841, 2
        %v843 = vadd.f32 %v841, %v842
        %v844 = vrot.slane %v843, 1
        %v845 = vadd.f32 %v843, %v844
        %v846 = vmul.f32 %v845, 0.007874016
        %v847 = vmul.f32 %v777, %v777
        %v848 = vmul.f32 %v778, %v778
        %v849 = vmul.f32 %v779, %v779
        %v850 = vmul.f32 %v780, %v780
        %v851 = vmul.f32 %v781, %v781
        %v852 = vmul.f32 %v782, %v782
        %v853 = vmul.f32 %v783, %v783
        %v854 = vmul.f32 %v784, %v784
        %v855 = vmul.f32 %v785, %v785
        %v856 = vmul.f32 %v786, %v786
        %v857 = vmul.f32 %v787, %v787
        %v858 = vmul.f32 %v788, %v788
        %v859 = vmul.f32 %v789, %v789
        %v860 = vmul.f32 %v790, %v790
        %v861 = vmul.f32 %v791, %v791
        %v862 = vmul.f32 %v792, %v792
        %v863 = vmul.f32 %v793, %v793
        %v864 = vmul.f32 %v794, %v794
        %v865 = vmul.f32 %v795, %v795
        %v866 = vmul.f32 %v796, %v796
        %v867 = vmul.f32 %v797, %v797
        %v868 = vmul.f32 %v798, %v798
        %v869 = vmul.f32 %v799, %v799
        %v870 = vmul.f32 %v800, %v800
        %v871 = vmul.f32 %v801, %v801
        %v872 = vmul.f32 %v802, %v802
        %v873 = vmul.f32 %v803, %v803
        %v874 = vmul.f32 %v804, %v804
        %v875 = vmul.f32 %v805, %v805
        %v876 = vmul.f32 %v806, %v806
        %v877 = vmul.f32 %v807, %v807
        %v878 = vmul.f32 %v808, %v808
        %v879 = vadd.f32 %v847, %v848
        %v880 = vadd.f32 %v879, %v849
        %v881 = vadd.f32 %v880, %v850
        %v882 = vadd.f32 %v881, %v851
        %v883 = vadd.f32 %v882, %v852
        %v884 = vadd.f32 %v883, %v853
        %v885 = vadd.f32 %v884, %v854
        %v886 = vadd.f32 %v885, %v855
        %v887 = vadd.f32 %v886, %v856
        %v888 = vadd.f32 %v887, %v857
        %v889 = vadd.f32 %v888, %v858
        %v890 = vadd.f32 %v889, %v859
        %v891 = vadd.f32 %v890, %v860
        %v892 = vadd.f32 %v891, %v861
        %v893 = vadd.f32 %v892, %v862
        %v894 = vadd.f32 %v893, %v863
        %v895 = vadd.f32 %v894, %v864
        %v896 = vadd.f32 %v895, %v865
        %v897 = vadd.f32 %v896, %v866
        %v898 = vadd.f32 %v897, %v867
        %v899 = vadd.f32 %v898, %v868
        %v900 = vadd.f32 %v899, %v869
        %v901 = vadd.f32 %v900, %v870
        %v902 = vadd.f32 %v901, %v871
        %v903 = vadd.f32 %v902, %v872
        %v904 = vadd.f32 %v903, %v873
        %v905 = vadd.f32 %v904, %v874
        %v906 = vadd.f32 %v905, %v875
        %v907 = vadd.f32 %v906, %v876
        %v908 = vadd.f32 %v907, %v877
        %v909 = vadd.f32 %v908, %v878
        %910 = vadd.xlane.f32.xlu0 %v909
        %v911 = vpop.xlane.xlu0 %910
        %v912 = vrot.slane %v911, 4
        %v913 = vadd.f32 %v911, %v912
        %v914 = vrot.slane %v913, 2
        %v915 = vadd.f32 %v913, %v914
        %v916 = vrot.slane %v915, 1
        %v917 = vadd.f32 %v915, %v916
        %s918 = vtos %v917
        %v919 = vmul.f32 %v846, %v846
        %vm920 = vcmask 1040384
        %v921 = vsel %vm920, %v919, 0.0
        %922 = vadd.xlane.f32.xlu0 %v921
        %v923 = vpop.xlane.xlu0 %922
        %v924 = vrot.slane %v923, 4
        %v925 = vadd.f32 %v923, %v924
        %v926 = vrot.slane %v925, 2
        %v927 = vadd.f32 %v925, %v926
        %v928 = vrot.slane %v927, 1
        %v929 = vadd.f32 %v927, %v928
        %s930 = vtos %v929
        %v931 = vld [vmem:[#allocation3] sm:$0x1]
        %s932 = ssub.f32 %s918, %s930
        %v933 = vstv %s932
        %v934 = vadd.f32 %v931, %v933
        %vm935 = vcmask 0
        %936 = vst.msk [vmem:[#allocation3] sm:$0x1] %vm935, %v934
        %v937 = vld [vmem:[#allocation3] sm:$0x1]
        %v938 = vmul.f32 %v937, 1.5258789e-05
        %939 = vst.msk [vmem:[#allocation9] sm:$0x1] %vm935, %v938
        // Predicated region
        $region41: #{tpu_custom_call.1} parent=27 // pred_check
          %p940 = pneg %p78
        $region42: #{tpu_custom_call.1} parent=27 // pred_check_branch
          %942 = sbr.rel (%p940) target = $region44
        $region43: #{tpu_custom_call.1} parent=27 // pred_region
          %s944 = ssub.s32 16, 16
          %945 = vsyncadd [#allocation6], %s944
          %s947 = sshll.u32 [#allocation9], 4
          %s948 = int_to_ptr.vmem [resolvable:$true] %s947
          %950 = dma.vmem_to_hbm [thread:$0]  %s948, 16, %s2, [#allocation6]
        $region44: #{tpu_custom_call.1} parent=27 // pred_fallthru
          _
        // Predicated region
        $region45: #{tpu_custom_call.1} parent=27 // pred_check
          %p951 = pneg %p78
        $region46: #{tpu_custom_call.1} parent=27 // pred_check_branch
          %953 = sbr.rel (%p951) target = $region48
        $region47: #{tpu_custom_call.1} parent=27 // pred_region
          %954 = dma.done [#allocation6], 16
        $region48: #{tpu_custom_call.1} parent=27 // pred_fallthru
          _
      $region28: #{tpu_custom_call.1} parent=5 // pred_fallthru
        _
      %p955 = scmp.le.s32.totalorder 2, %s13
      // Predicated region
      $region49: #{tpu_custom_call.1} parent=5 // pred_check
        %p956 = pneg %p955
      $region50: #{tpu_custom_call.1} parent=5 // pred_check_branch
        %958 = sbr.rel (%p956) target = $region52
      $region51: #{tpu_custom_call.1} parent=5 // pred_region
        %s959 = ssub.s32 %s13, 2
      $region52: #{tpu_custom_call.1} parent=5 // pred_fallthru
        _
    $region6: #{tpu_custom_call.1} parent=1 // loop_footer
      %s17 = sadd.s32 1, %s13
    $region7: #{tpu_custom_call.1} parent=1 // loop_footer_branch
      %12 = sbr.rel target = $region3
    $region8: #{tpu_custom_call.1} parent=1 // loop_exit
      _
    %960 = vsyncpa [#allocation5], 1
    %s961 = scalar_lea.sflag [#allocation5], 1
    %962 = vsyncpa %s961, 1
    %963 = vsyncpa [#allocation8], 1
    %s964 = scalar_lea.sflag [#allocation8], 1
    %965 = vsyncpa %s964, 1
    %966 = vsyncpa [#allocation6], 1
    %s967 = scalar_lea.sflag [#allocation6], 1
    %968 = vsyncpa %s967, 1

</llo_original>
